<compile_context>
chip_gen: v6e
topology: v6e:2x2x1
jax: 0.10.0
libtpu: 0.0.40
codegen_flags: <defaults>
</compile_context>

<pallas_src>
import functools

import jax
import jax.numpy as jnp
from jax import lax
from jax.experimental import pallas as pl
from jax.experimental.pallas import tpu as pltpu


def _smoe_kernel(n_tok_ref, x_ref, w_ref, avg_scaled_ref, *out_refs,
                 top_k, training, tc, compute_dtype):
    if training:
        idx_ref, score_ref, psum_ref = out_refs
    else:
        idx_ref, score_ref = out_refs

    w = w_ref[...].astype(compute_dtype)          # (E, d_model), resident block
    avg_scaled = avg_scaled_ref[...]              # (E, 1) f32, alpha pre-folded
    E = w.shape[0]
    tm = x_ref.shape[0]
    n_tokens = n_tok_ref[0]                       # SMEM scalar (prefetched)
    base = pl.program_id(0) * tm

    neg_inf = jnp.float32(-jnp.inf)
    psum_acc = None

    # Lane-chunked post-matmul work: each chunk only holds a few (E, tc) f32
    # temporaries live, so a large DMA tile (tm) never spills the vreg file.
    for c in range(tm // tc):
        # x arrives in its HBM dtype; cast to bf16 only here, right before the
        # MXU (no separate wrapper-side convert pass over x).
        x_c = x_ref[c * tc:(c + 1) * tc, :].astype(compute_dtype)   # (tc, d)
        # (E, tc) = W @ x_c^T, f32 MXU accumulation.  Tokens stay lane-dense;
        # every per-token reduction below is a cheap sublane reduction over E.
        logits_t = lax.dot_general(
            w, x_c, (((1,), (1,)), ((), ())),
            preferred_element_type=jnp.float32)
        balanced_t = logits_t - avg_scaled

        if training:
            # softmax(logits) over experts; partial batch-prob sum over the
            # valid tokens of this chunk.  The last grid block can contain
            # OOB garbage columns (possibly NaN/Inf) -> mask with where(), not
            # a multiply, so they cannot poison the sum.
            col = (lax.broadcasted_iota(jnp.int32, (1, tc), 1)
                   + base + c * tc)
            valid = col < n_tokens                                   # (1, tc)
            m = jnp.max(logits_t, axis=0, keepdims=True)
            e = jnp.exp(logits_t - m)
            inv = pl.reciprocal(jnp.sum(e, axis=0, keepdims=True), approx=True)
            probs = jnp.where(valid, e * inv, 0.0)                   # (E, tc)
            part = jnp.sum(probs, axis=1, keepdims=True)             # (E, 1)
            psum_acc = part if psum_acc is None else psum_acc + part

        # Iterative top-k (k small & static) over the expert (sublane) axis.
        iota_e = lax.broadcasted_iota(jnp.int32, (E, tc), 0)
        work = balanced_t
        idx_rows, val_rows = [], []
        for _ in range(top_k):
            mmax = jnp.max(work, axis=0, keepdims=True)              # (1, tc)
            is_max = work == mmax
            idx = jnp.min(jnp.where(is_max, iota_e, E),
                          axis=0, keepdims=True)                     # first argmax
            sel = iota_e == idx
            orig = jnp.max(jnp.where(sel, logits_t, neg_inf),
                           axis=0, keepdims=True)
            idx_rows.append(idx)
            val_rows.append(orig)
            work = jnp.where(sel, neg_inf, work)

        topk_idx_t = jnp.concatenate(idx_rows, axis=0)               # (k, tc)
        topk_logits_t = jnp.concatenate(val_rows, axis=0)            # (k, tc)

        # softmax over the k gathered ORIGINAL logits
        # (== scatter(-inf) + softmax + gather in torch).
        mk = jnp.max(topk_logits_t, axis=0, keepdims=True)
        ek = jnp.exp(topk_logits_t - mk)
        inv_k = pl.reciprocal(jnp.sum(ek, axis=0, keepdims=True), approx=True)
        scores_t = ek * inv_k

        idx_ref[:, c * tc:(c + 1) * tc] = topk_idx_t.astype(idx_ref.dtype)
        score_ref[:, c * tc:(c + 1) * tc] = scores_t.astype(score_ref.dtype)

    if training:
        psum_ref[...] = psum_acc[None, :, :]                         # (1, E, 1)


def smoe_momentum_forward(inp, gate_w, avg_logits, *, top_k=2, alpha=1.0,
                          beta=0.9, tm=512, tc=512, training=True,
                          compute_dtype=jnp.bfloat16,
                          index_dtype=jnp.int32, score_dtype=jnp.float32):
    """SMoE_Momentum gate forward.

    inp:        (N, d_model) activations (fed to the kernel in this dtype).
    gate_w:     (E, d_model) gate weight (torch nn.Linear orientation).
    avg_logits: (E,) momentum buffer (f32).

    tm: token DMA tile (multiple of 128).  Sweep per generation: keep the
        double-buffered x tile (2*tm*d_model*itemsize) <= ~6-7 MiB on v5e,
        ~16 MiB on v6e, <= ~16 MiB on v7x (and prefer G >= 2 there so both
        TensorCores get work under the "parallel" grid axis).
    tc: lane-chunk for the post-matmul work (multiple of 128, divides tm).
    index_dtype/score_dtype: set to int16/bfloat16 to halve writeback traffic
        when d_model is small (outputs are a large fraction of HBM bytes).

    Returns (top_k_indices (N, k), top_k_scores (N, k), new_avg_logits (E,)).
    """
    N, d_model = inp.shape
    E = gate_w.shape[0]
    assert top_k <= E, "top_k must be <= tot_expert"
    assert tm % 128 == 0 and tc % 128 == 0 and tm % tc == 0

    G = pl.cdiv(N, tm)                      # no padding of x; last block partial

    # Fold alpha into the resident penalty vector (one fewer per-step mul).
    avg_scaled = (avg_logits.astype(jnp.float32) * alpha).reshape(E, 1)
    n_tok = jnp.array([N], dtype=jnp.int32)  # SMEM scalar prefetch

    kernel = functools.partial(_smoe_kernel, top_k=top_k, training=training,
                               tc=tc, compute_dtype=compute_dtype)

    out_shape = [
        jax.ShapeDtypeStruct((top_k, N), index_dtype),
        jax.ShapeDtypeStruct((top_k, N), score_dtype),
    ]
    out_specs = [
        pl.BlockSpec((top_k, tm), lambda i, n: (0, i)),
        pl.BlockSpec((top_k, tm), lambda i, n: (0, i)),
    ]
    if training:
        # Per-step partial batch-prob sums; reduced below (keeps grid parallel).
        out_shape.append(jax.ShapeDtypeStruct((G, E, 1), jnp.float32))
        out_specs.append(pl.BlockSpec((1, E, 1), lambda i, n: (i, 0, 0)))

    # Explicit VMEM budget: double-buffered x tile in its HBM dtype + resident
    # W / penalty + double-buffered outputs, with slack for f32 temporaries.
    x_bytes = 2 * tm * d_model * jnp.dtype(inp.dtype).itemsize
    w_bytes = 2 * E * d_model * jnp.dtype(gate_w.dtype).itemsize
    o_bytes = 2 * top_k * tm * (jnp.dtype(index_dtype).itemsize
                                + jnp.dtype(score_dtype).itemsize)
    vmem_limit = min(64 << 20,
                     max(16 << 20,
                         int(1.5 * (x_bytes + w_bytes + o_bytes)) + (4 << 20)))

    outs = pl.pallas_call(
        kernel,
        out_shape=tuple(out_shape),
        grid_spec=pltpu.PrefetchScalarGridSpec(
            num_scalar_prefetch=1,
            grid=(G,),
            in_specs=[
                pl.BlockSpec((tm, d_model), lambda i, n: (i, 0)),
                pl.BlockSpec((E, d_model), lambda i, n: (0, 0)),
                pl.BlockSpec((E, 1), lambda i, n: (0, 0)),
            ],
            out_specs=out_specs,
        ),
        compiler_params=pltpu.CompilerParams(
            dimension_semantics=("parallel",),
            vmem_limit_bytes=vmem_limit),
    )(n_tok, inp, gate_w, avg_scaled)

    if training:
        idx_t, scores_t, psum = outs
    else:
        idx_t, scores_t = outs

    # Tiny layout plumbing back to the torch (N, k) convention.  If the
    # downstream dispatch can consume (k, N) directly, return idx_t/scores_t.
    idx = idx_t.T
    scores = scores_t.T

    if training:
        mean_batch_probs = jnp.sum(psum, axis=(0, 2)) / jnp.float32(N)   # (E,)
        new_avg = (beta * avg_logits.astype(jnp.float32)
                   + (1.0 - beta) * mean_batch_probs)
    else:
        new_avg = avg_logits.astype(jnp.float32)
    return idx, scores, new_avg


if __name__ == "__main__":
    # Module config: d_model=32, num_expert=4, world_size=2 -> tot_expert=8, top_k=2.
    d_model = 32
    num_expert = 4
    world_size = 2
    tot_expert = num_expert * world_size
    top_k = 2
    N = 16  # flattened token count (small demo; single partial 256-token tile)

    key = jax.random.PRNGKey(0)
    kx, kw = jax.random.split(key)
    x = jax.random.normal(kx, (N, d_model), dtype=jnp.float32)
    gate_w = (jax.random.normal(kw, (tot_expert, d_model), dtype=jnp.float32)
              * (1.0 / jnp.sqrt(d_model)))           # torch nn.Linear weight layout
    avg_logits = jnp.zeros((tot_expert,), dtype=jnp.float32)   # registered buffer

    idx, scores, new_avg = smoe_momentum_forward(
        x, gate_w, avg_logits, top_k=top_k, alpha=1.0, beta=0.9,
        tm=256, tc=256, training=True, compute_dtype=jnp.bfloat16)
    jax.block_until_ready((idx, scores, new_avg))

    # Pure-JAX reference with the same bf16-matmul / f32-accumulation numerics.
    logits_ref = jnp.dot(x.astype(jnp.bfloat16), gate_w.astype(jnp.bfloat16).T,
                         preferred_element_type=jnp.float32)
    balanced_ref = logits_ref - 1.0 * avg_logits[None, :]
    ref_idx = jnp.argsort(-balanced_ref, axis=-1)[:, :top_k]
    assert jnp.all(jnp.sort(idx, axis=-1) == jnp.sort(ref_idx, axis=-1))
    gathered = jnp.take_along_axis(logits_ref, idx.astype(jnp.int32), axis=-1)
    ref_scores = jax.nn.softmax(gathered, axis=-1)
    assert jnp.allclose(scores, ref_scores, atol=1e-2)   # approx-recip softmax
    probs_ref = jax.nn.softmax(logits_ref, axis=-1)
    ref_new_avg = 0.9 * avg_logits + 0.1 * jnp.mean(probs_ref, axis=0)
    assert jnp.allclose(new_avg, ref_new_avg, atol=1e-2)

    print("KERNEL_OK")
</pallas_src>

<mosaic_0001>
module attributes {stable_mosaic.version = 11 : i64} {
  func.func @_smoe_kernel(%arg0: i32, %arg1: memref<1xi32, #tpu.memory_space<smem>>, %arg2: memref<256x32xf32, #tpu.memory_space<vmem>>, %arg3: memref<8x32xf32, #tpu.memory_space<vmem>>, %arg4: memref<8x1xf32, #tpu.memory_space<vmem>>, %arg5: memref<2x256xi32, #tpu.memory_space<vmem>>, %arg6: memref<2x256xf32, #tpu.memory_space<vmem>>, %arg7: memref<1x8x1xf32, #tpu.memory_space<vmem>>) attributes {dimension_semantics = [#tpu.dimension_semantics<parallel>], iteration_bounds = array<i64: 1>, scalar_prefetch = 1 : i64, scratch_operands = 0 : i64, tpu.core_type = #tpu.core_type<tc>, window_params = [{transform_indices = @transform_0, window_bounds = array<i64: 256, 32>}, {pipeline_mode = #tpu.pipeline_mode<synchronous>, transform_indices = @transform_1, window_bounds = array<i64: 8, 32>}, {pipeline_mode = #tpu.pipeline_mode<synchronous>, transform_indices = @transform_2, window_bounds = array<i64: 8, 1>}, {transform_indices = @transform_3, window_bounds = array<i64: 2, 256>}, {transform_indices = @transform_4, window_bounds = array<i64: 2, 256>}, {transform_indices = @transform_5, window_bounds = array<i64: 1, 8, 1>}]} {
    %c0 = arith.constant 0 : index
    %c0_0 = arith.constant 0 : index
    %0 = vector.load %arg3[%c0, %c0_0] : memref<8x32xf32, #tpu.memory_space<vmem>>, vector<8x32xf32>
    %1 = arith.truncf %0 : vector<8x32xf32> to vector<8x32xbf16>
    %c0_1 = arith.constant 0 : index
    %c0_2 = arith.constant 0 : index
    %2 = vector.load %arg4[%c0_1, %c0_2] : memref<8x1xf32, #tpu.memory_space<vmem>>, vector<8x1xf32>
    %c0_3 = arith.constant 0 : index
    %3 = memref.load %arg1[%c0_3] : memref<1xi32, #tpu.memory_space<smem>>
    %c256_i32 = arith.constant 256 : i32
    %4 = arith.muli %arg0, %c256_i32 : i32
    %c0_4 = arith.constant 0 : index
    %c0_5 = arith.constant 0 : index
    %5 = vector.load %arg2[%c0_4, %c0_5] : memref<256x32xf32, #tpu.memory_space<vmem>>, vector<256x32xf32>
    %6 = arith.truncf %5 : vector<256x32xf32> to vector<256x32xbf16>
    %cst = arith.constant dense<0.000000e+00> : vector<8x256xf32>
    %7 = tpu.matmul %1, %6, %cst {dimension_numbers = #tpu.dot_dimension_numbers<[1], [1], [0], [0], [0, 0, 1, 0], [], []>} : vector<8x32xbf16>, vector<256x32xbf16>, vector<8x256xf32> -> vector<8x256xf32>
    %8 = vector.broadcast %2 : vector<8x1xf32> to vector<8x256xf32>
    %9 = arith.subf %7, %8 : vector<8x256xf32>
    %10 = tpu.iota {dimensions = array<i32: 1>} : vector<1x256xi32>
    %11 = vector.broadcast %4 : i32 to vector<1x256xi32>
    %12 = arith.addi %10, %11 : vector<1x256xi32>
    %c0_i32 = arith.constant 0 : i32
    %13 = vector.broadcast %c0_i32 : i32 to vector<1x256xi32>
    %14 = arith.addi %12, %13 : vector<1x256xi32>
    %15 = vector.broadcast %3 : i32 to vector<1x256xi32>
    %16 = arith.cmpi slt, %14, %15 : vector<1x256xi32>
    %cst_6 = arith.constant dense<0xFF800000> : vector<256xf32>
    %17 = vector.multi_reduction <maximumf>, %7, %cst_6 [0] : vector<8x256xf32> to vector<256xf32>
    %18 = vector.shape_cast %17 : vector<256xf32> to vector<1x256xf32>
    %19 = vector.broadcast %18 : vector<1x256xf32> to vector<8x256xf32>
    %20 = arith.subf %7, %19 : vector<8x256xf32>
    %21 = math.exp %20 : vector<8x256xf32>
    %cst_7 = arith.constant dense<0.000000e+00> : vector<256xf32>
    %22 = vector.multi_reduction <add>, %21, %cst_7 [0] : vector<8x256xf32> to vector<256xf32>
    %23 = vector.shape_cast %22 : vector<256xf32> to vector<1x256xf32>
    %24 = tpu.reciprocal %23 {approx = true} : vector<1x256xf32> -> vector<1x256xf32>
    %25 = vector.broadcast %24 : vector<1x256xf32> to vector<8x256xf32>
    %26 = arith.mulf %21, %25 : vector<8x256xf32>
    %cst_8 = arith.constant 0.000000e+00 : f32
    %27 = vector.shape_cast %16 : vector<1x256xi1> to vector<1x256xi1>
    %28 = vector.broadcast %27 : vector<1x256xi1> to vector<8x256xi1>
    %29 = vector.broadcast %cst_8 : f32 to vector<8x256xf32>
    %30 = arith.select %28, %26, %29 : vector<8x256xi1>, vector<8x256xf32>
    %cst_9 = arith.constant dense<0.000000e+00> : vector<8xf32>
    %31 = vector.multi_reduction <add>, %30, %cst_9 [1] : vector<8x256xf32> to vector<8xf32>
    %32 = vector.shape_cast %31 : vector<8xf32> to vector<8x1xf32>
    %33 = tpu.iota {dimensions = array<i32: 0>} : vector<8x256xi32>
    %cst_10 = arith.constant dense<0xFF800000> : vector<256xf32>
    %34 = vector.multi_reduction <maximumf>, %9, %cst_10 [0] : vector<8x256xf32> to vector<256xf32>
    %35 = vector.shape_cast %34 : vector<256xf32> to vector<1x256xf32>
    %36 = vector.broadcast %35 : vector<1x256xf32> to vector<8x256xf32>
    %37 = arith.cmpf oeq, %9, %36 : vector<8x256xf32>
    %c8_i32 = arith.constant 8 : i32
    %38 = vector.broadcast %c8_i32 : i32 to vector<8x256xi32>
    %39 = arith.select %37, %33, %38 : vector<8x256xi1>, vector<8x256xi32>
    %cst_11 = arith.constant dense<2147483647> : vector<256xi32>
    %40 = vector.multi_reduction <minsi>, %39, %cst_11 [0] : vector<8x256xi32> to vector<256xi32>
    %41 = vector.shape_cast %40 : vector<256xi32> to vector<1x256xi32>
    %42 = vector.broadcast %41 : vector<1x256xi32> to vector<8x256xi32>
    %43 = arith.cmpi eq, %33, %42 : vector<8x256xi32>
    %cst_12 = arith.constant 0xFF800000 : f32
    %44 = vector.broadcast %cst_12 : f32 to vector<8x256xf32>
    %45 = arith.select %43, %7, %44 : vector<8x256xi1>, vector<8x256xf32>
    %cst_13 = arith.constant dense<0xFF800000> : vector<256xf32>
    %46 = vector.multi_reduction <maximumf>, %45, %cst_13 [0] : vector<8x256xf32> to vector<256xf32>
    %47 = vector.shape_cast %46 : vector<256xf32> to vector<1x256xf32>
    %cst_14 = arith.constant 0xFF800000 : f32
    %48 = vector.broadcast %cst_14 : f32 to vector<8x256xf32>
    %49 = arith.select %43, %48, %9 : vector<8x256xi1>, vector<8x256xf32>
    %cst_15 = arith.constant dense<0xFF800000> : vector<256xf32>
    %50 = vector.multi_reduction <maximumf>, %49, %cst_15 [0] : vector<8x256xf32> to vector<256xf32>
    %51 = vector.shape_cast %50 : vector<256xf32> to vector<1x256xf32>
    %52 = vector.broadcast %51 : vector<1x256xf32> to vector<8x256xf32>
    %53 = arith.cmpf oeq, %49, %52 : vector<8x256xf32>
    %c8_i32_16 = arith.constant 8 : i32
    %54 = vector.broadcast %c8_i32_16 : i32 to vector<8x256xi32>
    %55 = arith.select %53, %33, %54 : vector<8x256xi1>, vector<8x256xi32>
    %cst_17 = arith.constant dense<2147483647> : vector<256xi32>
    %56 = vector.multi_reduction <minsi>, %55, %cst_17 [0] : vector<8x256xi32> to vector<256xi32>
    %57 = vector.shape_cast %56 : vector<256xi32> to vector<1x256xi32>
    %58 = vector.broadcast %57 : vector<1x256xi32> to vector<8x256xi32>
    %59 = arith.cmpi eq, %33, %58 : vector<8x256xi32>
    %cst_18 = arith.constant 0xFF800000 : f32
    %60 = vector.broadcast %cst_18 : f32 to vector<8x256xf32>
    %61 = arith.select %59, %7, %60 : vector<8x256xi1>, vector<8x256xf32>
    %cst_19 = arith.constant dense<0xFF800000> : vector<256xf32>
    %62 = vector.multi_reduction <maximumf>, %61, %cst_19 [0] : vector<8x256xf32> to vector<256xf32>
    %63 = vector.shape_cast %62 : vector<256xf32> to vector<1x256xf32>
    %64 = tpu.concatenate %41, %57 in 0 : vector<1x256xi32>, vector<1x256xi32> -> vector<2x256xi32>
    %65 = tpu.concatenate %47, %63 in 0 : vector<1x256xf32>, vector<1x256xf32> -> vector<2x256xf32>
    %cst_20 = arith.constant dense<0xFF800000> : vector<256xf32>
    %66 = vector.multi_reduction <maximumf>, %65, %cst_20 [0] : vector<2x256xf32> to vector<256xf32>
    %67 = vector.shape_cast %66 : vector<256xf32> to vector<1x256xf32>
    %68 = vector.broadcast %67 : vector<1x256xf32> to vector<2x256xf32>
    %69 = arith.subf %65, %68 : vector<2x256xf32>
    %70 = math.exp %69 : vector<2x256xf32>
    %cst_21 = arith.constant dense<0.000000e+00> : vector<256xf32>
    %71 = vector.multi_reduction <add>, %70, %cst_21 [0] : vector<2x256xf32> to vector<256xf32>
    %72 = vector.shape_cast %71 : vector<256xf32> to vector<1x256xf32>
    %73 = tpu.reciprocal %72 {approx = true} : vector<1x256xf32> -> vector<1x256xf32>
    %74 = vector.broadcast %73 : vector<1x256xf32> to vector<2x256xf32>
    %75 = arith.mulf %70, %74 : vector<2x256xf32>
    %c0_22 = arith.constant 0 : index
    %c0_23 = arith.constant 0 : index
    %76 = vector.load %arg5[%c0_22, %c0_23] : memref<2x256xi32, #tpu.memory_space<vmem>>, vector<2x256xi32>
    tpu.vector_store %arg5[%c0_22, %c0_23], %64 {strides = array<i32>} : memref<2x256xi32, #tpu.memory_space<vmem>>, vector<2x256xi32>,
    %c0_24 = arith.constant 0 : index
    %c0_25 = arith.constant 0 : index
    %77 = vector.load %arg6[%c0_24, %c0_25] : memref<2x256xf32, #tpu.memory_space<vmem>>, vector<2x256xf32>
    tpu.vector_store %arg6[%c0_24, %c0_25], %75 {strides = array<i32>} : memref<2x256xf32, #tpu.memory_space<vmem>>, vector<2x256xf32>,
    %78 = vector.shape_cast %32 : vector<8x1xf32> to vector<1x8x1xf32>
    %c0_26 = arith.constant 0 : index
    %c0_27 = arith.constant 0 : index
    %c0_28 = arith.constant 0 : index
    %79 = vector.load %arg7[%c0_26, %c0_27, %c0_28] : memref<1x8x1xf32, #tpu.memory_space<vmem>>, vector<1x8x1xf32>
    tpu.vector_store %arg7[%c0_26, %c0_27, %c0_28], %78 {strides = array<i32>} : memref<1x8x1xf32, #tpu.memory_space<vmem>>, vector<1x8x1xf32>,
    return
  }
  func.func @transform_0(%arg0: i32, %arg1: memref<1xi32, #tpu.memory_space<smem>>) -> (i32, i32) {
    %c0_i32 = arith.constant 0 : i32
    %c0_i32_0 = arith.constant 0 : i32
    return %arg0, %c0_i32 : i32, i32
  }
  func.func @transform_1(%arg0: i32, %arg1: memref<1xi32, #tpu.memory_space<smem>>) -> (i32, i32) {
    %c0_i32 = arith.constant 0 : i32
    %c0_i32_0 = arith.constant 0 : i32
    %c0_i32_1 = arith.constant 0 : i32
    return %c0_i32, %c0_i32_0 : i32, i32
  }
  func.func @transform_2(%arg0: i32, %arg1: memref<1xi32, #tpu.memory_space<smem>>) -> (i32, i32) {
    %c0_i32 = arith.constant 0 : i32
    %c0_i32_0 = arith.constant 0 : i32
    %c0_i32_1 = arith.constant 0 : i32
    return %c0_i32, %c0_i32_0 : i32, i32
  }
  func.func @transform_3(%arg0: i32, %arg1: memref<1xi32, #tpu.memory_space<smem>>) -> (i32, i32) {
    %c0_i32 = arith.constant 0 : i32
    %c0_i32_0 = arith.constant 0 : i32
    return %c0_i32, %arg0 : i32, i32
  }
  func.func @transform_4(%arg0: i32, %arg1: memref<1xi32, #tpu.memory_space<smem>>) -> (i32, i32) {
    %c0_i32 = arith.constant 0 : i32
    %c0_i32_0 = arith.constant 0 : i32
    return %c0_i32, %arg0 : i32, i32
  }
  func.func @transform_5(%arg0: i32, %arg1: memref<1xi32, #tpu.memory_space<smem>>) -> (i32, i32, i32) {
    %c0_i32 = arith.constant 0 : i32
    %c0_i32_0 = arith.constant 0 : i32
    %c0_i32_1 = arith.constant 0 : i32
    return %arg0, %c0_i32, %c0_i32_0 : i32, i32, i32
  }
}

</mosaic_0001>

<llo_original>
// kernel: tpu_custom_call.1
$region0: #{tpu_custom_call.1}
  #allocation0 [shape = 'u32[]', space=smem, size = 0x4, offset = 0x4, fixed_abs, tag = 'smem constant byte address 0x4 - core index']
  #allocation1 [shape = 'u32[144,128]{1,0:T(1,128)}', space=vmem, size = 0x12000, scoped, tag = 'internal scratch']
  #allocation2 [shape = 's32[1]{0}', space=sflag, size = 0x4, scoped, tag = 'scoped memory for tpu_custom_call.1']
  #allocation3 [shape = 's32[1]{0:T(128)S(6)}', space=smem, size = 0x200, scoped, tag = 'prefetched SMEM operand 0']
  %s0 = inlined_call_operand.<no memory space> [shape: s32[1], index: 0, kind: input, shape index: {}]
  %s1 = inlined_call_operand.hbm [shape: f32[16,32], index: 1, kind: input, shape index: {}]
  %s2 = inlined_call_operand.vmem [shape: f32[8,32], index: 2, kind: input, shape index: {}]
  %s3 = inlined_call_operand.vmem [shape: f32[8,1], index: 3, kind: input, shape index: {}]
  %s4 = inlined_call_operand.hbm [shape: s32[2,16], index: 4, kind: output, shape index: {0}]
  %s5 = inlined_call_operand.hbm [shape: f32[2,16], index: 5, kind: output, shape index: {1}]
  %s6 = inlined_call_operand.vmem [shape: f32[1,8,1], index: 6, kind: output, shape index: {2}]
  %7 = xla_tuple %s4, %s5, %s6
  %s8 = sld [smem:[#allocation0]]
  $region42: #{tpu_custom_call.1} parent=0
    _
  %s10 = ssub.s32 1, %s8
  %s11 = scalar_select 0, %s10, %s8
  %12 = sst [smem:[#allocation3]] %s0
  $region1: #{tpu_custom_call.1} parent=0
    #allocation4 [shape = 'u8[131072]{0}', space=vmem, size = 0x20000, scoped, tag = 'input window, operand 1, single buffered']
    #allocation5 [shape = 's32[1]{0}', space=sflag, size = 0x4, scoped, tag = 'scoped memory for tpu_custom_call.1']
    #allocation6 [shape = 's32[1]{0}', space=sflag, size = 0x4, scoped, tag = 'scoped memory for tpu_custom_call.1']
    #allocation7 [shape = 'u8[2048]{0}', space=vmem, size = 0x800, scoped, tag = 'output window, operand 0, single buffered']
    #allocation8 [shape = 'u8[2048]{0}', space=vmem, size = 0x800, scoped, tag = 'output window, operand 1, single buffered']
    #allocation9 [shape = 's32[1]{0}', space=sflag, size = 0x4, scoped, tag = 'scoped memory for tpu_custom_call.1']
    %13 = vsyncpa [#allocation5], 0
    %14 = vsyncpa [#allocation6], 0
    %15 = vsyncpa [#allocation9], 0
    // Predicated region
    $region2: #{tpu_custom_call.1} parent=1 // pred_check
      _
    $region3: #{tpu_custom_call.1} parent=1 // pred_check_branch
      %17 = sbr.rel (0) target = $region5
    $region4: #{tpu_custom_call.1} parent=1 // pred_region
      %s19 = ssub.s32 4096, 256
      %20 = vsyncadd [#allocation5], %s19
      %s21 = sshll.u32 [#allocation4], 4
      %s22 = int_to_ptr.vmem [resolvable:$true] %s21
      %27 = dma.hbm_to_vmem [thread:$0]  %s1, 256, %s22, [#allocation5], 128, 128, 8
    $region5: #{tpu_custom_call.1} parent=1 // pred_fallthru
      _
    // Predicated region
    $region6: #{tpu_custom_call.1} parent=1 // pred_check
      _
    $region7: #{tpu_custom_call.1} parent=1 // pred_check_branch
      %29 = sbr.rel (0) target = $region9
    $region8: #{tpu_custom_call.1} parent=1 // pred_region
      _
    $region9: #{tpu_custom_call.1} parent=1 // pred_fallthru
      _
    // Predicated region
    $region10: #{tpu_custom_call.1} parent=1 // pred_check
      _
    $region11: #{tpu_custom_call.1} parent=1 // pred_check_branch
      %31 = sbr.rel (0) target = $region13
    $region12: #{tpu_custom_call.1} parent=1 // pred_region
      _
    $region13: #{tpu_custom_call.1} parent=1 // pred_fallthru
      _
    // Predicated region
    $region14: #{tpu_custom_call.1} parent=1 // pred_check
      _
    $region15: #{tpu_custom_call.1} parent=1 // pred_check_branch
      %33 = sbr.rel (0) target = $region17
    $region16: #{tpu_custom_call.1} parent=1 // pred_region
      %34 = dma.done [#allocation5], 4096
    $region17: #{tpu_custom_call.1} parent=1 // pred_fallthru
      _
    %v36 = vld [vmem:[%s2] sm:$0xff]
    %v37 = vpack.c.bf16 %v36, %v36
    %v38 = vld [vmem:[%s3] sm:$0xff]
    %s39 = sld [smem:[#allocation3]]
    %s40 = smul.u32 0, 256
    %v41 = vld [vmem:[#allocation4] sm:$0xff]
    %v42 = vld [vmem:[#allocation4 + $0x8] sm:$0xff]
    %v43 = vld [vmem:[#allocation4 + $0x10] sm:$0xff]
    %v44 = vld [vmem:[#allocation4 + $0x18] sm:$0xff]
    %v45 = vld [vmem:[#allocation4 + $0x20] sm:$0xff]
    %v46 = vld [vmem:[#allocation4 + $0x28] sm:$0xff]
    %v47 = vld [vmem:[#allocation4 + $0x30] sm:$0xff]
    %v48 = vld [vmem:[#allocation4 + $0x38] sm:$0xff]
    %v49 = vld [vmem:[#allocation4 + $0x40] sm:$0xff]
    %v50 = vld [vmem:[#allocation4 + $0x48] sm:$0xff]
    %v51 = vld [vmem:[#allocation4 + $0x50] sm:$0xff]
    %v52 = vld [vmem:[#allocation4 + $0x58] sm:$0xff]
    %v53 = vld [vmem:[#allocation4 + $0x60] sm:$0xff]
    %v54 = vld [vmem:[#allocation4 + $0x68] sm:$0xff]
    %v55 = vld [vmem:[#allocation4 + $0x70] sm:$0xff]
    %v56 = vld [vmem:[#allocation4 + $0x78] sm:$0xff]
    %v57 = vld [vmem:[#allocation4 + $0x80] sm:$0xff]
    %v58 = vld [vmem:[#allocation4 + $0x88] sm:$0xff]
    %v59 = vld [vmem:[#allocation4 + $0x90] sm:$0xff]
    %v60 = vld [vmem:[#allocation4 + $0x98] sm:$0xff]
    %v61 = vld [vmem:[#allocation4 + $0xa0] sm:$0xff]
    %v62 = vld [vmem:[#allocation4 + $0xa8] sm:$0xff]
    %v63 = vld [vmem:[#allocation4 + $0xb0] sm:$0xff]
    %v64 = vld [vmem:[#allocation4 + $0xb8] sm:$0xff]
    %v65 = vld [vmem:[#allocation4 + $0xc0] sm:$0xff]
    %v66 = vld [vmem:[#allocation4 + $0xc8] sm:$0xff]
    %v67 = vld [vmem:[#allocation4 + $0xd0] sm:$0xff]
    %v68 = vld [vmem:[#allocation4 + $0xd8] sm:$0xff]
    %v69 = vld [vmem:[#allocation4 + $0xe0] sm:$0xff]
    %v70 = vld [vmem:[#allocation4 + $0xe8] sm:$0xff]
    %v71 = vld [vmem:[#allocation4 + $0xf0] sm:$0xff]
    %v72 = vld [vmem:[#allocation4 + $0xf8] sm:$0xff]
    %v73 = vpack.c.bf16 %v42, %v41
    %v74 = vpack.c.bf16 %v44, %v43
    %v75 = vpack.c.bf16 %v46, %v45
    %v76 = vpack.c.bf16 %v48, %v47
    %v77 = vpack.c.bf16 %v50, %v49
    %v78 = vpack.c.bf16 %v52, %v51
    %v79 = vpack.c.bf16 %v54, %v53
    %v80 = vpack.c.bf16 %v56, %v55
    %v81 = vpack.c.bf16 %v58, %v57
    %v82 = vpack.c.bf16 %v60, %v59
    %v83 = vpack.c.bf16 %v62, %v61
    %v84 = vpack.c.bf16 %v64, %v63
    %v85 = vpack.c.bf16 %v66, %v65
    %v86 = vpack.c.bf16 %v68, %v67
    %v87 = vpack.c.bf16 %v70, %v69
    %v88 = vpack.c.bf16 %v72, %v71
    %vm89 = vcmask 261120
    %v91 = vsel %vm89, %v37, 0
    %v94 = vsel %vm89, %v73, 0
    %v97 = vsel %vm89, %v74, 0
    %v100 = vsel %vm89, %v75, 0
    %v103 = vsel %vm89, %v76, 0
    %v106 = vsel %vm89, %v77, 0
    %v109 = vsel %vm89, %v78, 0
    %v112 = vsel %vm89, %v79, 0
    %v115 = vsel %vm89, %v80, 0
    %v118 = vsel %vm89, %v81, 0
    %v121 = vsel %vm89, %v82, 0
    %v124 = vsel %vm89, %v83, 0
    %v127 = vsel %vm89, %v84, 0
    %v130 = vsel %vm89, %v85, 0
    %v133 = vsel %vm89, %v86, 0
    %v136 = vsel %vm89, %v87, 0
    %v139 = vsel %vm89, %v88, 0
    %141 = vmatprep.subr.bf16.mxu0 0
    %142 = vmatpush1.bf16.xpose.msra.mxu0 %v115
    %143 = vmatprep.subr.bf16.mxu0 0
    %144 = vmatpush1.bf16.xpose.msra.mxu0 %v112
    %145 = vmatprep.subr.bf16.mxu0 0
    %146 = vmatpush1.bf16.xpose.msra.mxu0 %v109
    %147 = vmatprep.subr.bf16.mxu0 0
    %148 = vmatpush1.bf16.xpose.msra.mxu0 %v106
    %149 = vmatprep.subr.bf16.mxu0 0
    %150 = vmatpush1.bf16.xpose.msra.mxu0 %v103
    %151 = vmatprep.subr.bf16.mxu0 0
    %152 = vmatpush1.bf16.xpose.msra.mxu0 %v100
    %153 = vmatprep.subr.bf16.mxu0 0
    %154 = vmatpush1.bf16.xpose.msra.mxu0 %v97
    %155 = vmatprep.subr.bf16.mxu0 0
    %156 = vmatpush1.bf16.xpose.msra.mxu0 %v94
    %157 = vmatprep.subr.bf16.mxu0 0
    %158 = vmatpush2.bf16.xpose.msra.mxu0 %v139
    %159 = vmatprep.subr.bf16.mxu0 0
    %160 = vmatpush2.bf16.xpose.msra.mxu0 %v136
    %161 = vmatprep.subr.bf16.mxu0 0
    %162 = vmatpush2.bf16.xpose.msra.mxu0 %v133
    %163 = vmatprep.subr.bf16.mxu0 0
    %164 = vmatpush2.bf16.xpose.msra.mxu0 %v130
    %165 = vmatprep.subr.bf16.mxu0 0
    %166 = vmatpush2.bf16.xpose.msra.mxu0 %v127
    %167 = vmatprep.subr.bf16.mxu0 0
    %168 = vmatpush2.bf16.xpose.msra.mxu0 %v124
    %169 = vmatprep.subr.bf16.mxu0 0
    %170 = vmatpush2.bf16.xpose.msra.mxu0 %v121
    %171 = vmatprep.subr.bf16.mxu0 0
    %172 = vmatpush2.bf16.xpose.msra.mxu0 %v118
    %173 = vmatprep.mubr.bf16.mxu0 0
    %174 = vmatmul.mubr.bf16.gmra.mxu0 %v91
    %v175 = vpop.f32.mrf.mxu0
    %v176 = vadd.f32 0.0, %v175
    %v177 = vpop.f32.mrf.mxu0
    %v178 = vadd.f32 0.0, %v177
    %v179 = vpop.f32.mrf.mxu0
    %v180 = vpop.f32.mrf.mxu0
    %181 = vdwg.mxu0
    %183 = vset.pattern.permute.xlu0 0
    %184 = vperm.xlu0 %183, %v38
    %v185 = vpop.permute.xlu0 %184
    %v187 = vsub.f32 %v176, %v185
    %v188 = vsub.f32 %v178, %v185
    %v189 = vlaneseq
    %v190 = vand.u32 %v189, 127
    %v191 = vadd.s32 %v190, 128
    %v192 = vstv %s40
    %v193 = vadd.s32 %v190, %v192
    %v194 = vadd.s32 %v191, %v192
    %v195 = vstv %s39
    %vm196 = vcmp.lt.s32.totalorder %v193, %v195
    %vm197 = vcmp.lt.s32.totalorder %v194, %v195
    %v198 = vrot.slane %v176, 4
    %v199 = vmax.f32 %v176, %v198
    %v200 = vrot.slane %v199, 2
    %v201 = vmax.f32 %v199, %v200
    %v202 = vrot.slane %v201, 1
    %v203 = vmax.f32 %v201, %v202
    %v204 = vrot.slane %v178, 4
    %v205 = vmax.f32 %v178, %v204
    %v206 = vrot.slane %v205, 2
    %v207 = vmax.f32 %v205, %v206
    %v208 = vrot.slane %v207, 1
    %v209 = vmax.f32 %v207, %v208
    %v210 = vsub.f32 %v176, %v203
    %v211 = vsub.f32 %v178, %v209
    %v212 = vmul.f32 %v210, 1.442695
    %v213 = vpow.pop %v212
    %v214 = vmul.f32 %v211, 1.442695
    %v215 = vpow.pop %v214
    %v216 = vrot.slane %v213, 4
    %v217 = vadd.f32 %v213, %v216
    %v218 = vrot.slane %v217, 2
    %v219 = vadd.f32 %v217, %v218
    %v220 = vrot.slane %v219, 1
    %v221 = vadd.f32 %v219, %v220
    %v222 = vrot.slane %v215, 4
    %v223 = vadd.f32 %v215, %v222
    %v224 = vrot.slane %v223, 2
    %v225 = vadd.f32 %v223, %v224
    %v226 = vrot.slane %v225, 1
    %v227 = vadd.f32 %v225, %v226
    %v228 = vrcp.pop %v221
    %v229 = vrcp.pop %v227
    %v230 = vmul.f32 %v213, %v228
    %v231 = vmul.f32 %v215, %v229
    %v232 = vsel %vm196, 1, 0
    %v233 = vsel %vm197, 1, 0
    %vm234 = vcmp.eq.s32.totalorder %v232, 1
    %vm235 = vcmp.eq.s32.totalorder %v233, 1
    %v236 = vsel %vm234, %v230, 0.0
    %v237 = vsel %vm235, %v231, 0.0
    %v238 = vadd.f32 %v236, %v237
    %239 = vadd.xlane.f32.xlu0 %v238
    %v240 = vpop.xlane.xlu0 %239
    %v241 = vlaneseq
    %v242 = vshrl.u32 %v241, 7
    %v243 = vrot.slane %v187, 4
    %v244 = vmax.f32 %v187, %v243
    %v245 = vrot.slane %v244, 2
    %v246 = vmax.f32 %v244, %v245
    %v247 = vrot.slane %v246, 1
    %v248 = vmax.f32 %v246, %v247
    %v249 = vrot.slane %v188, 4
    %v250 = vmax.f32 %v188, %v249
    %v251 = vrot.slane %v250, 2
    %v252 = vmax.f32 %v250, %v251
    %v253 = vrot.slane %v252, 1
    %v254 = vmax.f32 %v252, %v253
    %vm255 = vcmp.eq.f32.partialorder %v187, %v248
    %vm256 = vcmp.eq.f32.partialorder %v188, %v254
    %v257 = vsel %vm255, %v242, 8
    %v258 = vsel %vm256, %v242, 8
    %v259 = vrot.slane %v257, 4
    %vm260 = vcmp.lt.s32.totalorder %v257, %v259
    %v261 = vsel %vm260, %v257, %v259
    %v262 = vrot.slane %v261, 2
    %vm263 = vcmp.lt.s32.totalorder %v261, %v262
    %v264 = vsel %vm263, %v261, %v262
    %v265 = vrot.slane %v264, 1
    %vm266 = vcmp.lt.s32.totalorder %v264, %v265
    %v267 = vsel %vm266, %v264, %v265
    %v268 = vrot.slane %v258, 4
    %vm269 = vcmp.lt.s32.totalorder %v258, %v268
    %v270 = vsel %vm269, %v258, %v268
    %v271 = vrot.slane %v270, 2
    %vm272 = vcmp.lt.s32.totalorder %v270, %v271
    %v273 = vsel %vm272, %v270, %v271
    %v274 = vrot.slane %v273, 1
    %vm275 = vcmp.lt.s32.totalorder %v273, %v274
    %v276 = vsel %vm275, %v273, %v274
    %vm277 = vcmp.eq.s32.totalorder %v242, %v267
    %vm278 = vcmp.eq.s32.totalorder %v242, %v276
    %v279 = vsel %vm277, %v176, -inf
    %v280 = vsel %vm278, %v178, -inf
    %v281 = vrot.slane %v279, 4
    %v282 = vmax.f32 %v279, %v281
    %v283 = vrot.slane %v282, 2
    %v284 = vmax.f32 %v282, %v283
    %v285 = vrot.slane %v284, 1
    %v286 = vmax.f32 %v284, %v285
    %v287 = vrot.slane %v280, 4
    %v288 = vmax.f32 %v280, %v287
    %v289 = vrot.slane %v288, 2
    %v290 = vmax.f32 %v288, %v289
    %v291 = vrot.slane %v290, 1
    %v292 = vmax.f32 %v290, %v291
    %v293 = vsel %vm277, -inf, %v187
    %v294 = vsel %vm278, -inf, %v188
    %v295 = vrot.slane %v293, 4
    %v296 = vmax.f32 %v293, %v295
    %v297 = vrot.slane %v296, 2
    %v298 = vmax.f32 %v296, %v297
    %v299 = vrot.slane %v298, 1
    %v300 = vmax.f32 %v298, %v299
    %v301 = vrot.slane %v294, 4
    %v302 = vmax.f32 %v294, %v301
    %v303 = vrot.slane %v302, 2
    %v304 = vmax.f32 %v302, %v303
    %v305 = vrot.slane %v304, 1
    %v306 = vmax.f32 %v304, %v305
    %vm307 = vcmp.eq.f32.partialorder %v293, %v300
    %vm308 = vcmp.eq.f32.partialorder %v294, %v306
    %v309 = vsel %vm307, %v242, 8
    %v310 = vsel %vm308, %v242, 8
    %v311 = vrot.slane %v309, 4
    %vm312 = vcmp.lt.s32.totalorder %v309, %v311
    %v313 = vsel %vm312, %v309, %v311
    %v314 = vrot.slane %v313, 2
    %vm315 = vcmp.lt.s32.totalorder %v313, %v314
    %v316 = vsel %vm315, %v313, %v314
    %v317 = vrot.slane %v316, 1
    %vm318 = vcmp.lt.s32.totalorder %v316, %v317
    %v319 = vsel %vm318, %v316, %v317
    %v320 = vrot.slane %v310, 4
    %vm321 = vcmp.lt.s32.totalorder %v310, %v320
    %v322 = vsel %vm321, %v310, %v320
    %v323 = vrot.slane %v322, 2
    %vm324 = vcmp.lt.s32.totalorder %v322, %v323
    %v325 = vsel %vm324, %v322, %v323
    %v326 = vrot.slane %v325, 1
    %vm327 = vcmp.lt.s32.totalorder %v325, %v326
    %v328 = vsel %vm327, %v325, %v326
    %vm329 = vcmp.eq.s32.totalorder %v242, %v319
    %vm330 = vcmp.eq.s32.totalorder %v242, %v328
    %v331 = vsel %vm329, %v176, -inf
    %v332 = vsel %vm330, %v178, -inf
    %v333 = vrot.slane %v331, 4
    %v334 = vmax.f32 %v331, %v333
    %v335 = vrot.slane %v334, 2
    %v336 = vmax.f32 %v334, %v335
    %v337 = vrot.slane %v336, 1
    %v338 = vmax.f32 %v336, %v337
    %v339 = vrot.slane %v332, 4
    %v340 = vmax.f32 %v332, %v339
    %v341 = vrot.slane %v340, 2
    %v342 = vmax.f32 %v340, %v341
    %v343 = vrot.slane %v342, 1
    %v344 = vmax.f32 %v342, %v343
    %vm345 = vcmask 1040384
    %v346 = vsel %vm345, %v267, %v319
    %v347 = vsel %vm345, %v276, %v328
    %v348 = vsel %vm345, %v286, %v338
    %v349 = vsel %vm345, %v292, %v344
    %vm350 = vcmask 1041408
    %v351 = vsel %vm350, %v348, -inf
    %v352 = vrot.slane %v351, 4
    %v353 = vmax.f32 %v351, %v352
    %v354 = vrot.slane %v353, 2
    %v355 = vmax.f32 %v353, %v354
    %v356 = vrot.slane %v355, 1
    %v357 = vmax.f32 %v355, %v356
    %v358 = vsel %vm350, %v349, -inf
    %v359 = vrot.slane %v358, 4
    %v360 = vmax.f32 %v358, %v359
    %v361 = vrot.slane %v360, 2
    %v362 = vmax.f32 %v360, %v361
    %v363 = vrot.slane %v362, 1
    %v364 = vmax.f32 %v362, %v363
    %v365 = vsub.f32 %v348, %v357
    %v366 = vsub.f32 %v349, %v364
    %v367 = vmul.f32 %v365, 1.442695
    %v368 = vpow.pop %v367
    %v369 = vmul.f32 %v366, 1.442695
    %v370 = vpow.pop %v369
    %v371 = vsel %vm350, %v368, 0.0
    %v372 = vrot.slane %v371, 4
    %v373 = vadd.f32 %v371, %v372
    %v374 = vrot.slane %v373, 2
    %v375 = vadd.f32 %v373, %v374
    %v376 = vrot.slane %v375, 1
    %v377 = vadd.f32 %v375, %v376
    %v378 = vsel %vm350, %v370, 0.0
    %v379 = vrot.slane %v378, 4
    %v380 = vadd.f32 %v378, %v379
    %v381 = vrot.slane %v380, 2
    %v382 = vadd.f32 %v380, %v381
    %v383 = vrot.slane %v382, 1
    %v384 = vadd.f32 %v382, %v383
    %v385 = vrcp.pop %v377
    %v386 = vrcp.pop %v384
    %v387 = vmul.f32 %v368, %v385
    %v388 = vmul.f32 %v370, %v386
    %v389 = vcombine.low %v346, %v347
    %v391 = vunpack.c.l.s4 1983009808
    %v392 = vunpack.c.0.s8 %v391
    %v393 = vlaneseq
    %v394 = vshrl.u32 %v393, 7
    %v395 = vsub.s32 %v392, %v394
    %v396 = vrot.slane %v389, %v395
    %397 = vst [vmem:[#allocation7] sm:$0xf] %v396
    %v400 = vcombine.low %v387, %v388
    %v402 = vunpack.c.l.s4 1983009808
    %v403 = vunpack.c.0.s8 %v402
    %v404 = vlaneseq
    %v405 = vshrl.u32 %v404, 7
    %v406 = vsub.s32 %v403, %v405
    %v407 = vrot.slane %v400, %v406
    %409 = vst [vmem:[#allocation8] sm:$0xf] %v407
    %vm410 = vcmask 7168
    %411 = vst.msk [vmem:[%s6] sm:$0xff] %vm410, %v240
    // Predicated region
    $region18: #{tpu_custom_call.1} parent=1 // pred_check
      _
    $region19: #{tpu_custom_call.1} parent=1 // pred_check_branch
      %413 = sbr.rel (0) target = $region21
    $region20: #{tpu_custom_call.1} parent=1 // pred_region
      %s415 = ssub.s32 64, 32
      %416 = vsyncadd [#allocation6], %s415
      %s418 = sshll.u32 [#allocation7], 4
      %s419 = int_to_ptr.vmem [resolvable:$true] %s418
      %421 = dma.vmem_to_hbm [thread:$0]  %s419, 32, %s4, [#allocation6]
    $region21: #{tpu_custom_call.1} parent=1 // pred_fallthru
      _
    // Predicated region
    $region22: #{tpu_custom_call.1} parent=1 // pred_check
      _
    $region23: #{tpu_custom_call.1} parent=1 // pred_check_branch
      %423 = sbr.rel (0) target = $region25
    $region24: #{tpu_custom_call.1} parent=1 // pred_region
      %s425 = ssub.s32 64, 32
      %426 = vsyncadd [#allocation9], %s425
      %s428 = sshll.u32 [#allocation8], 4
      %s429 = int_to_ptr.vmem [resolvable:$true] %s428
      %431 = dma.vmem_to_hbm [thread:$0]  %s429, 32, %s5, [#allocation9]
    $region25: #{tpu_custom_call.1} parent=1 // pred_fallthru
      _
    // Predicated region
    $region26: #{tpu_custom_call.1} parent=1 // pred_check
      _
    $region27: #{tpu_custom_call.1} parent=1 // pred_check_branch
      %433 = sbr.rel (0) target = $region29
    $region28: #{tpu_custom_call.1} parent=1 // pred_region
      _
    $region29: #{tpu_custom_call.1} parent=1 // pred_fallthru
      _
    // Predicated region
    $region30: #{tpu_custom_call.1} parent=1 // pred_check
      _
    $region31: #{tpu_custom_call.1} parent=1 // pred_check_branch
      %435 = sbr.rel (0) target = $region33
    $region32: #{tpu_custom_call.1} parent=1 // pred_region
      %436 = dma.done [#allocation6], 64
    $region33: #{tpu_custom_call.1} parent=1 // pred_fallthru
      _
    // Predicated region
    $region34: #{tpu_custom_call.1} parent=1 // pred_check
      _
    $region35: #{tpu_custom_call.1} parent=1 // pred_check_branch
      %438 = sbr.rel (0) target = $region37
    $region36: #{tpu_custom_call.1} parent=1 // pred_region
      %439 = dma.done [#allocation9], 64
    $region37: #{tpu_custom_call.1} parent=1 // pred_fallthru
      _
    // Predicated region
    $region38: #{tpu_custom_call.1} parent=1 // pred_check
      _
    $region39: #{tpu_custom_call.1} parent=1 // pred_check_branch
      %441 = sbr.rel (0) target = $region41
    $region40: #{tpu_custom_call.1} parent=1 // pred_region
      _
    $region41: #{tpu_custom_call.1} parent=1 // pred_fallthru
      _
    %442 = vsyncpa [#allocation5], 1
    %443 = vsyncpa [#allocation6], 1
    %444 = vsyncpa [#allocation9], 1

</llo_original>
